<compile_context>
chip_gen: v7x
topology: tpu7x:2x2x1
jax: 0.10.0
libtpu: 0.0.40
codegen_flags: <defaults>
</compile_context>

<pallas_src>
import jax
import jax.numpy as jnp
from jax.experimental import pallas as pl
from jax.experimental.pallas import tpu as pltpu


def _additive_mix_kernel(x_ref, w_ref, lmix_ref, tgt_ref, ctl_ref, tot_ref):
    xb = x_ref[...]                      # (BB, C, L)  batch block of inputs
    w = w_ref[...]                       # (2T, C)     stacked [wt; wc]
    bb = xb.shape[0]
    t = tgt_ref.shape[1]                 # T

    # ---- both heads in one batched matmul: logits[b, t, l] = sum_c w[t,c] x[b,c,l]
    wb = jnp.broadcast_to(w[None], (bb,) + w.shape)            # (BB, 2T, C)
    logits = jnp.einsum("btc,bcl->btl", wb, xb,
                        preferred_element_type=jnp.float32)    # (BB, 2T, L)

    # ---- log-softmax over L for both heads at once ----
    m = jnp.max(logits, axis=-1, keepdims=True)
    lse = m + jnp.log(jnp.sum(jnp.exp(logits - m), axis=-1, keepdims=True))
    lp = logits - lse                                          # (BB, 2T, L)

    # ---- additive mixture in log-space (pivot form, single exp per element) ----
    # lmix rows [:T] = log(mix), rows [T:] = log(1 - mix); broadcast over L.
    wlp = lp + lmix_ref[...]                                   # (BB, 2T, L)

    t_lp = lp[:, :t, :]                                        # (BB, T, L)
    c_lp = lp[:, t:, :]
    wa = wlp[:, :t, :]                                         # log(mix)   + t_lp
    wb2 = wlp[:, t:, :]                                        # log(1-mix) + c_lp

    hi = jnp.maximum(wa, wb2)
    lo = jnp.minimum(wa, wb2)
    tot = hi + jnp.log(1.0 + jnp.exp(lo - hi))                 # one exp / element

    tgt_ref[...] = t_lp
    ctl_ref[...] = c_lp
    tot_ref[...] = tot


def new_additive_mix(x, params, *, block_b=8):
    """x: (B, C, L) float32. Returns dict mirroring NewAdditiveMix.forward."""
    B, C, L = x.shape
    wt, wc = params["wt"], params["wc"]            # (T, C) each
    w1, b1 = params["w1"], params["b1"]            # (U, C), (U, 1)
    w2, b2 = params["w2"], params["b2"]            # (T, U), (T, 1)
    T = wt.shape[0]

    # ---- mix-coeff MLP hoisted out of the kernel: batched over B in plain XLA ----
    pooled = x.mean(-1)                                        # (B, C)
    h = jax.nn.relu(pooled @ w1.T + b1[:, 0])                  # (B, U)
    z = h @ w2.T + b2[:, 0]                                    # (B, T)
    mix = jax.nn.sigmoid(z)                                    # (B, T)
    log_mix = jax.nn.log_sigmoid(z)                            # log(mix), stable
    log_1m = jax.nn.log_sigmoid(-z)                            # log(1-mix), stable
    lmix = jnp.concatenate([log_mix, log_1m], axis=1)[..., None]   # (B, 2T, 1)

    # ---- stacked head weights: one (2T, C) operand for both heads ----
    w = jnp.concatenate([wt, wc], axis=0)                      # (2T, C)

    # ---- batch blocking: grid over ceil(B / bb) blocks of bb batch elements ----
    bb = max(1, min(block_b, B))
    n_blk = pl.cdiv(B, bb)
    Bp = n_blk * bb
    if Bp != B:
        pad = Bp - B
        x_p = jnp.pad(x, ((0, pad), (0, 0), (0, 0)))
        lmix_p = jnp.pad(lmix, ((0, pad), (0, 0), (0, 0)))
    else:
        x_p, lmix_p = x, lmix

    out_shapes = (
        jax.ShapeDtypeStruct((Bp, T, L), jnp.float32),   # target logprob
        jax.ShapeDtypeStruct((Bp, T, L), jnp.float32),   # control logprob
        jax.ShapeDtypeStruct((Bp, T, L), jnp.float32),   # total logprob
    )

    # VMEM budget: double-buffered input/output blocks + resident weights.
    # Cap at 64 MiB so the limit is also valid on v7x's smaller physical VMEM.
    blk_bytes = 4 * (bb * C * L + 2 * T * C + bb * 2 * T + 3 * bb * T * L)
    vmem_limit = int(min(max(4 * blk_bytes, 32 * 1024 * 1024), 64 * 1024 * 1024))

    grid_spec = pltpu.PrefetchScalarGridSpec(
        num_scalar_prefetch=0,
        grid=(n_blk,),
        in_specs=[
            pl.BlockSpec((bb, C, L), lambda b: (b, 0, 0)),        # x block
            pl.BlockSpec((2 * T, C), lambda b: (0, 0)),           # stacked weights
            pl.BlockSpec((bb, 2 * T, 1), lambda b: (b, 0, 0)),    # log mix coeffs
        ],
        out_specs=[
            pl.BlockSpec((bb, T, L), lambda b: (b, 0, 0)),
            pl.BlockSpec((bb, T, L), lambda b: (b, 0, 0)),
            pl.BlockSpec((bb, T, L), lambda b: (b, 0, 0)),
        ],
    )

    tgt, ctl, tot = pl.pallas_call(
        _additive_mix_kernel,
        out_shape=out_shapes,
        grid_spec=grid_spec,
        compiler_params=pltpu.CompilerParams(
            dimension_semantics=("parallel",),   # batch-block axis feeds both v7x TCs
            vmem_limit_bytes=vmem_limit,
        ),
    )(x_p, w, lmix_p)

    if Bp != B:
        tgt, ctl, tot = tgt[:B], ctl[:B], tot[:B]

    return {"target": tgt, "control": ctl, "total": tot, "mix_coeff": mix}


def _reference(x, params):
    """Pure-JAX reference mirroring the PyTorch forward exactly."""
    wt, wc = params["wt"], params["wc"]
    w1, b1 = params["w1"], params["b1"]
    w2, b2 = params["w2"], params["b2"]

    t_logit = jnp.einsum("tc,bcl->btl", wt, x)
    c_logit = jnp.einsum("tc,bcl->btl", wc, x)

    pooled = x.mean(-1)                              # (B, C)
    h = jax.nn.relu(pooled @ w1.T + b1[:, 0])
    mix = jax.nn.sigmoid(h @ w2.T + b2[:, 0])        # (B, T)
    mix_e = mix[..., None]                           # (B, T, 1)

    t_lp = t_logit - jax.scipy.special.logsumexp(t_logit, axis=-1, keepdims=True)
    c_lp = c_logit - jax.scipy.special.logsumexp(c_logit, axis=-1, keepdims=True)
    max_lp = jnp.maximum(t_lp, c_lp)
    tot = max_lp + jnp.log(mix_e * jnp.exp(t_lp - max_lp)
                           + (1.0 - mix_e) * jnp.exp(c_lp - max_lp))
    return {"target": t_lp, "control": c_lp, "total": tot, "mix_coeff": mix}


if __name__ == "__main__":
    B, C, L = 2, 4, 16       # batch, in-channels, sequence length
    T, U = 4, 32             # num_tasks, MLP units

    key = jax.random.PRNGKey(0)
    kx, k1, k2, k3, k4, k5, k6 = jax.random.split(key, 7)

    x = jax.random.normal(kx, (B, C, L), dtype=jnp.float32)

    params = {
        "wt": 0.1 * jax.random.normal(k1, (T, C), dtype=jnp.float32),   # head_target conv weight
        "wc": 0.1 * jax.random.normal(k2, (T, C), dtype=jnp.float32),   # head_control conv weight
        "w1": 0.1 * jax.random.normal(k3, (U, C), dtype=jnp.float32),   # dense1 weight
        "b1": 0.1 * jax.random.normal(k4, (U, 1), dtype=jnp.float32),   # dense1 bias
        "w2": 0.1 * jax.random.normal(k5, (T, U), dtype=jnp.float32),   # dense2 weight
        "b2": 0.1 * jax.random.normal(k6, (T, 1), dtype=jnp.float32),   # dense2 bias
    }

    out = new_additive_mix(x, params)
    jax.block_until_ready(out)

    ref = _reference(x, params)
    for k in ("target", "control", "total", "mix_coeff"):
        assert out[k].shape == ref[k].shape, (k, out[k].shape, ref[k].shape)
        assert jnp.allclose(out[k], ref[k], atol=1e-4, rtol=1e-4), k

    print("KERNEL_OK")
</pallas_src>

<mosaic_0001>
module attributes {stable_mosaic.version = 11 : i64} {
  func.func @_additive_mix_kernel(%arg0: i32, %arg1: memref<2x4x16xf32, #tpu.memory_space<vmem>>, %arg2: memref<8x4xf32, #tpu.memory_space<vmem>>, %arg3: memref<2x8x1xf32, #tpu.memory_space<vmem>>, %arg4: memref<2x4x16xf32, #tpu.memory_space<vmem>>, %arg5: memref<2x4x16xf32, #tpu.memory_space<vmem>>, %arg6: memref<2x4x16xf32, #tpu.memory_space<vmem>>) attributes {dimension_semantics = [#tpu.dimension_semantics<parallel>], iteration_bounds = array<i64: 1>, scalar_prefetch = 0 : i64, scratch_operands = 0 : i64, tpu.core_type = #tpu.core_type<tc>, window_params = [{transform_indices = @transform_0, window_bounds = array<i64: 2, 4, 16>}, {pipeline_mode = #tpu.pipeline_mode<synchronous>, transform_indices = @transform_1, window_bounds = array<i64: 8, 4>}, {transform_indices = @transform_2, window_bounds = array<i64: 2, 8, 1>}, {transform_indices = @transform_3, window_bounds = array<i64: 2, 4, 16>}, {transform_indices = @transform_4, window_bounds = array<i64: 2, 4, 16>}, {transform_indices = @transform_5, window_bounds = array<i64: 2, 4, 16>}]} {
    %c0 = arith.constant 0 : index
    %c0_0 = arith.constant 0 : index
    %c0_1 = arith.constant 0 : index
    %0 = vector.load %arg1[%c0, %c0_0, %c0_1] : memref<2x4x16xf32, #tpu.memory_space<vmem>>, vector<2x4x16xf32>
    %c0_2 = arith.constant 0 : index
    %c0_3 = arith.constant 0 : index
    %1 = vector.load %arg2[%c0_2, %c0_3] : memref<8x4xf32, #tpu.memory_space<vmem>>, vector<8x4xf32>
    %2 = vector.shape_cast %1 : vector<8x4xf32> to vector<1x8x4xf32>
    %3 = vector.shape_cast %2 : vector<1x8x4xf32> to vector<1x8x4xf32>
    %4 = vector.broadcast %3 : vector<1x8x4xf32> to vector<2x8x4xf32>
    "tpu.trace_start"() <{level = 10 : i32, message = "btc,bcl->btl"}> : () -> ()
    %cst = arith.constant dense<0.000000e+00> : vector<2x8x16xf32>
    %5 = tpu.matmul %4, %0, %cst {dimension_numbers = #tpu.dot_dimension_numbers<[2], [1], [1], [2], [0, 0, 0, 1, 1, 2], [0], [0]>} : vector<2x8x4xf32>, vector<2x4x16xf32>, vector<2x8x16xf32> -> vector<2x8x16xf32>
    "tpu.trace_stop"() : () -> ()
    %cst_4 = arith.constant dense<0xFF800000> : vector<2x8xf32>
    %6 = vector.multi_reduction <maximumf>, %5, %cst_4 [2] : vector<2x8x16xf32> to vector<2x8xf32>
    %7 = vector.shape_cast %6 : vector<2x8xf32> to vector<2x8x1xf32>
    %8 = vector.broadcast %7 : vector<2x8x1xf32> to vector<2x8x16xf32>
    %9 = arith.subf %5, %8 : vector<2x8x16xf32>
    %10 = math.exp %9 : vector<2x8x16xf32>
    %cst_5 = arith.constant dense<0.000000e+00> : vector<2x8xf32>
    %11 = vector.multi_reduction <add>, %10, %cst_5 [2] : vector<2x8x16xf32> to vector<2x8xf32>
    %12 = vector.shape_cast %11 : vector<2x8xf32> to vector<2x8x1xf32>
    %13 = math.log %12 : vector<2x8x1xf32>
    %14 = arith.addf %7, %13 : vector<2x8x1xf32>
    %15 = vector.broadcast %14 : vector<2x8x1xf32> to vector<2x8x16xf32>
    %16 = arith.subf %5, %15 : vector<2x8x16xf32>
    %c0_6 = arith.constant 0 : index
    %c0_7 = arith.constant 0 : index
    %c0_8 = arith.constant 0 : index
    %17 = vector.load %arg3[%c0_6, %c0_7, %c0_8] : memref<2x8x1xf32, #tpu.memory_space<vmem>>, vector<2x8x1xf32>
    %18 = vector.broadcast %17 : vector<2x8x1xf32> to vector<2x8x16xf32>
    %19 = arith.addf %16, %18 : vector<2x8x16xf32>
    %20 = vector.extract_strided_slice %16 {offsets = [0, 0, 0], sizes = [2, 4, 16], strides = [1, 1, 1]} : vector<2x8x16xf32> to vector<2x4x16xf32>
    %21 = vector.extract_strided_slice %16 {offsets = [0, 4, 0], sizes = [2, 4, 16], strides = [1, 1, 1]} : vector<2x8x16xf32> to vector<2x4x16xf32>
    %22 = vector.extract_strided_slice %19 {offsets = [0, 0, 0], sizes = [2, 4, 16], strides = [1, 1, 1]} : vector<2x8x16xf32> to vector<2x4x16xf32>
    %23 = vector.extract_strided_slice %19 {offsets = [0, 4, 0], sizes = [2, 4, 16], strides = [1, 1, 1]} : vector<2x8x16xf32> to vector<2x4x16xf32>
    %24 = arith.maximumf %22, %23 : vector<2x4x16xf32>
    %25 = arith.minimumf %22, %23 : vector<2x4x16xf32>
    %26 = arith.subf %25, %24 : vector<2x4x16xf32>
    %27 = math.exp %26 : vector<2x4x16xf32>
    %cst_9 = arith.constant 1.000000e+00 : f32
    %28 = vector.broadcast %cst_9 : f32 to vector<2x4x16xf32>
    %29 = arith.addf %28, %27 : vector<2x4x16xf32>
    %30 = math.log %29 : vector<2x4x16xf32>
    %31 = arith.addf %24, %30 : vector<2x4x16xf32>
    %c0_10 = arith.constant 0 : index
    %c0_11 = arith.constant 0 : index
    %c0_12 = arith.constant 0 : index
    %32 = vector.load %arg4[%c0_10, %c0_11, %c0_12] : memref<2x4x16xf32, #tpu.memory_space<vmem>>, vector<2x4x16xf32>
    tpu.vector_store %arg4[%c0_10, %c0_11, %c0_12], %20 {strides = array<i32>} : memref<2x4x16xf32, #tpu.memory_space<vmem>>, vector<2x4x16xf32>,
    %c0_13 = arith.constant 0 : index
    %c0_14 = arith.constant 0 : index
    %c0_15 = arith.constant 0 : index
    %33 = vector.load %arg5[%c0_13, %c0_14, %c0_15] : memref<2x4x16xf32, #tpu.memory_space<vmem>>, vector<2x4x16xf32>
    tpu.vector_store %arg5[%c0_13, %c0_14, %c0_15], %21 {strides = array<i32>} : memref<2x4x16xf32, #tpu.memory_space<vmem>>, vector<2x4x16xf32>,
    %c0_16 = arith.constant 0 : index
    %c0_17 = arith.constant 0 : index
    %c0_18 = arith.constant 0 : index
    %34 = vector.load %arg6[%c0_16, %c0_17, %c0_18] : memref<2x4x16xf32, #tpu.memory_space<vmem>>, vector<2x4x16xf32>
    tpu.vector_store %arg6[%c0_16, %c0_17, %c0_18], %31 {strides = array<i32>} : memref<2x4x16xf32, #tpu.memory_space<vmem>>, vector<2x4x16xf32>,
    return
  }
  func.func @transform_0(%arg0: i32) -> (i32, i32, i32) {
    %c0_i32 = arith.constant 0 : i32
    %c0_i32_0 = arith.constant 0 : i32
    %c0_i32_1 = arith.constant 0 : i32
    return %arg0, %c0_i32, %c0_i32_0 : i32, i32, i32
  }
  func.func @transform_1(%arg0: i32) -> (i32, i32) {
    %c0_i32 = arith.constant 0 : i32
    %c0_i32_0 = arith.constant 0 : i32
    %c0_i32_1 = arith.constant 0 : i32
    return %c0_i32, %c0_i32_0 : i32, i32
  }
  func.func @transform_2(%arg0: i32) -> (i32, i32, i32) {
    %c0_i32 = arith.constant 0 : i32
    %c0_i32_0 = arith.constant 0 : i32
    %c0_i32_1 = arith.constant 0 : i32
    return %arg0, %c0_i32, %c0_i32_0 : i32, i32, i32
  }
  func.func @transform_3(%arg0: i32) -> (i32, i32, i32) {
    %c0_i32 = arith.constant 0 : i32
    %c0_i32_0 = arith.constant 0 : i32
    %c0_i32_1 = arith.constant 0 : i32
    return %arg0, %c0_i32, %c0_i32_0 : i32, i32, i32
  }
  func.func @transform_4(%arg0: i32) -> (i32, i32, i32) {
    %c0_i32 = arith.constant 0 : i32
    %c0_i32_0 = arith.constant 0 : i32
    %c0_i32_1 = arith.constant 0 : i32
    return %arg0, %c0_i32, %c0_i32_0 : i32, i32, i32
  }
  func.func @transform_5(%arg0: i32) -> (i32, i32, i32) {
    %c0_i32 = arith.constant 0 : i32
    %c0_i32_0 = arith.constant 0 : i32
    %c0_i32_1 = arith.constant 0 : i32
    return %arg0, %c0_i32, %c0_i32_0 : i32, i32, i32
  }
}

</mosaic_0001>

<llo_original>
// kernel: tpu_custom_call.1
$region0: #{tpu_custom_call.1}
  #allocation0 [shape = 'u32[]', space=smem, size = 0x4, offset = 0x4, fixed_abs, tag = 'smem constant byte address 0x4 - core index']
  #allocation1 [shape = 'u32[144,128]{1,0:T(1,128)}', space=vmem, size = 0x12000, scoped, tag = 'internal scratch']
  %s0 = inlined_call_operand.vmem [shape: f32[2,4,16], index: 0, kind: input, shape index: {}]
  %s1 = inlined_call_operand.vmem [shape: f32[8,4], index: 1, kind: input, shape index: {}]
  %s2 = inlined_call_operand.vmem [shape: f32[2,8,1], index: 2, kind: input, shape index: {}]
  %s3 = inlined_call_operand.hbm [shape: f32[2,4,16], index: 3, kind: output, shape index: {0}]
  %s4 = inlined_call_operand.hbm [shape: f32[2,4,16], index: 4, kind: output, shape index: {1}]
  %s5 = inlined_call_operand.hbm [shape: f32[2,4,16], index: 5, kind: output, shape index: {2}]
  %6 = xla_tuple %s3, %s4, %s5
  %s7 = sld [smem:[#allocation0]]
  $region38: #{tpu_custom_call.1} parent=0
    _
  %s9 = ssub.s32 1, %s7
  %s10 = scalar_select 0, %s9, %s7
  $region1: #{tpu_custom_call.1} parent=0
    #allocation2 [shape = 'u8[4096]{0}', space=vmem, size = 0x1000, scoped, tag = 'output window, operand 0, single buffered']
    #allocation3 [shape = 's32[1]{0}', space=sflag, size = 0x4, scoped, tag = 'scoped memory for tpu_custom_call.1']
    #allocation4 [shape = 'u8[4096]{0}', space=vmem, size = 0x1000, scoped, tag = 'output window, operand 1, single buffered']
    #allocation5 [shape = 's32[1]{0}', space=sflag, size = 0x4, scoped, tag = 'scoped memory for tpu_custom_call.1']
    #allocation6 [shape = 'u8[4096]{0}', space=vmem, size = 0x1000, scoped, tag = 'output window, operand 2, single buffered']
    %11 = vsyncpa [#allocation3], 0
    %12 = vsyncpa [#allocation5], 0
    // Predicated region
    $region2: #{tpu_custom_call.1} parent=1 // pred_check
      _
    $region3: #{tpu_custom_call.1} parent=1 // pred_check_branch
      %14 = sbr.rel (0) target = $region5
    $region4: #{tpu_custom_call.1} parent=1 // pred_region
      _
    $region5: #{tpu_custom_call.1} parent=1 // pred_fallthru
      _
    // Predicated region
    $region6: #{tpu_custom_call.1} parent=1 // pred_check
      _
    $region7: #{tpu_custom_call.1} parent=1 // pred_check_branch
      %16 = sbr.rel (0) target = $region9
    $region8: #{tpu_custom_call.1} parent=1 // pred_region
      _
    $region9: #{tpu_custom_call.1} parent=1 // pred_fallthru
      _
    // Predicated region
    $region10: #{tpu_custom_call.1} parent=1 // pred_check
      _
    $region11: #{tpu_custom_call.1} parent=1 // pred_check_branch
      %18 = sbr.rel (0) target = $region13
    $region12: #{tpu_custom_call.1} parent=1 // pred_region
      _
    $region13: #{tpu_custom_call.1} parent=1 // pred_fallthru
      _
    %v19 = vld [vmem:[%s0] sm:$0xf]
    %v20 = vld [vmem:[%s0 + $0x4] sm:$0xf]
    %v21 = vld [vmem:[%s1] sm:$0xff]
    %vm22 = vcmask 31744
    %v24 = vsel %vm22, %v21, 0
    %vm26 = vcmask 1043456
    %v28 = vsel %vm26, %v19, 0
    %30 = vmatprep.subr.mxu0 0.0
    %31 = vmatpush1.msra.mxu0 %v28
    %32 = vmatprep.subr.mxu0 0.0
    %33 = vmatpush1.msra.mxu0 0.0
    %34 = vmatprep.subr.mxu0 0.0
    %35 = vmatpush1.msra.mxu0 0.0
    %36 = vmatprep.subr.mxu0 0.0
    %37 = vmatpush1.msra.mxu0 0.0
    %38 = vmatprep.subr.mxu0 0.0
    %39 = vmatpush1.msra.mxu0 0.0
    %40 = vmatprep.subr.mxu0 0.0
    %41 = vmatpush1.msra.mxu0 0.0
    %42 = vmatprep.subr.mxu0 0.0
    %43 = vmatpush1.msra.mxu0 0.0
    %44 = vmatprep.subr.mxu0 0.0
    %45 = vmatpush1.msra.mxu0 0.0
    %46 = vmatprep.subr.mxu0 0.0
    %47 = vmatpush1.msra.mxu0 0.0
    %48 = vmatprep.subr.mxu0 0.0
    %49 = vmatpush1.msra.mxu0 0.0
    %50 = vmatprep.subr.mxu0 0.0
    %51 = vmatpush1.msra.mxu0 0.0
    %52 = vmatprep.subr.mxu0 0.0
    %53 = vmatpush1.msra.mxu0 0.0
    %54 = vmatprep.subr.mxu0 0.0
    %55 = vmatpush1.msra.mxu0 0.0
    %56 = vmatprep.subr.mxu0 0.0
    %57 = vmatpush1.msra.mxu0 0.0
    %58 = vmatprep.subr.mxu0 0.0
    %59 = vmatpush1.msra.mxu0 0.0
    %60 = vmatprep.subr.mxu0 0.0
    %61 = vmatpush1.msra.mxu0 0.0
    %62 = vmatprep.subr.mxu0 0.0
    %63 = vmatpush1.msra.mxu0 0.0
    %64 = vmatprep.subr.mxu0 0.0
    %65 = vmatpush1.msra.mxu0 0.0
    %66 = vmatprep.subr.mxu0 0.0
    %67 = vmatpush1.msra.mxu0 0.0
    %68 = vmatprep.subr.mxu0 0.0
    %69 = vmatpush1.msra.mxu0 0.0
    %70 = vmatprep.subr.mxu0 0.0
    %71 = vmatpush1.msra.mxu0 0.0
    %72 = vmatprep.subr.mxu0 0.0
    %73 = vmatpush1.msra.mxu0 0.0
    %74 = vmatprep.subr.mxu0 0.0
    %75 = vmatpush1.msra.mxu0 0.0
    %76 = vmatprep.subr.mxu0 0.0
    %77 = vmatpush1.msra.mxu0 0.0
    %78 = vmatprep.subr.mxu0 0.0
    %79 = vmatpush1.msra.mxu0 0.0
    %80 = vmatprep.subr.mxu0 0.0
    %81 = vmatpush1.msra.mxu0 0.0
    %82 = vmatprep.subr.mxu0 0.0
    %83 = vmatpush1.msra.mxu0 0.0
    %84 = vmatprep.subr.mxu0 0.0
    %85 = vmatpush1.msra.mxu0 0.0
    %86 = vmatprep.subr.mxu0 0.0
    %87 = vmatpush1.msra.mxu0 0.0
    %88 = vmatprep.subr.mxu0 0.0
    %89 = vmatpush1.msra.mxu0 0.0
    %90 = vmatprep.subr.mxu0 0.0
    %91 = vmatpush1.msra.mxu0 0.0
    %92 = vmatprep.subr.mxu0 0.0
    %93 = vmatpush1.msra.mxu0 0.0
    %94 = vmatprep.mubr.f32.mxu0 0.0
    %95 = vmatmul.mubr.f32.gmra.mrb[0].mxu0 %v24
    %v96 = vpop.f32.mrb[0].mxu0
    %v97 = vadd.f32 0.0, %v96
    %v98 = vpop.f32.mrb[0].mxu0
    %99 = vdwg.mxu0
    %v101 = vsel %vm26, %v20, 0
    %103 = vmatprep.subr.mxu0 0.0
    %104 = vmatpush1.msra.mxu0 %v101
    %105 = vmatprep.subr.mxu0 0.0
    %106 = vmatpush1.msra.mxu0 0.0
    %107 = vmatprep.subr.mxu0 0.0
    %108 = vmatpush1.msra.mxu0 0.0
    %109 = vmatprep.subr.mxu0 0.0
    %110 = vmatpush1.msra.mxu0 0.0
    %111 = vmatprep.subr.mxu0 0.0
    %112 = vmatpush1.msra.mxu0 0.0
    %113 = vmatprep.subr.mxu0 0.0
    %114 = vmatpush1.msra.mxu0 0.0
    %115 = vmatprep.subr.mxu0 0.0
    %116 = vmatpush1.msra.mxu0 0.0
    %117 = vmatprep.subr.mxu0 0.0
    %118 = vmatpush1.msra.mxu0 0.0
    %119 = vmatprep.subr.mxu0 0.0
    %120 = vmatpush1.msra.mxu0 0.0
    %121 = vmatprep.subr.mxu0 0.0
    %122 = vmatpush1.msra.mxu0 0.0
    %123 = vmatprep.subr.mxu0 0.0
    %124 = vmatpush1.msra.mxu0 0.0
    %125 = vmatprep.subr.mxu0 0.0
    %126 = vmatpush1.msra.mxu0 0.0
    %127 = vmatprep.subr.mxu0 0.0
    %128 = vmatpush1.msra.mxu0 0.0
    %129 = vmatprep.subr.mxu0 0.0
    %130 = vmatpush1.msra.mxu0 0.0
    %131 = vmatprep.subr.mxu0 0.0
    %132 = vmatpush1.msra.mxu0 0.0
    %133 = vmatprep.subr.mxu0 0.0
    %134 = vmatpush1.msra.mxu0 0.0
    %135 = vmatprep.subr.mxu0 0.0
    %136 = vmatpush1.msra.mxu0 0.0
    %137 = vmatprep.subr.mxu0 0.0
    %138 = vmatpush1.msra.mxu0 0.0
    %139 = vmatprep.subr.mxu0 0.0
    %140 = vmatpush1.msra.mxu0 0.0
    %141 = vmatprep.subr.mxu0 0.0
    %142 = vmatpush1.msra.mxu0 0.0
    %143 = vmatprep.subr.mxu0 0.0
    %144 = vmatpush1.msra.mxu0 0.0
    %145 = vmatprep.subr.mxu0 0.0
    %146 = vmatpush1.msra.mxu0 0.0
    %147 = vmatprep.subr.mxu0 0.0
    %148 = vmatpush1.msra.mxu0 0.0
    %149 = vmatprep.subr.mxu0 0.0
    %150 = vmatpush1.msra.mxu0 0.0
    %151 = vmatprep.subr.mxu0 0.0
    %152 = vmatpush1.msra.mxu0 0.0
    %153 = vmatprep.subr.mxu0 0.0
    %154 = vmatpush1.msra.mxu0 0.0
    %155 = vmatprep.subr.mxu0 0.0
    %156 = vmatpush1.msra.mxu0 0.0
    %157 = vmatprep.subr.mxu0 0.0
    %158 = vmatpush1.msra.mxu0 0.0
    %159 = vmatprep.subr.mxu0 0.0
    %160 = vmatpush1.msra.mxu0 0.0
    %161 = vmatprep.subr.mxu0 0.0
    %162 = vmatpush1.msra.mxu0 0.0
    %163 = vmatprep.subr.mxu0 0.0
    %164 = vmatpush1.msra.mxu0 0.0
    %165 = vmatprep.subr.mxu0 0.0
    %166 = vmatpush1.msra.mxu0 0.0
    %167 = vmatprep.mubr.f32.mxu0 0.0
    %168 = vmatmul.mubr.f32.gmra.mrb[0].mxu0 %v24
    %v169 = vpop.f32.mrb[0].mxu0
    %v170 = vadd.f32 0.0, %v169
    %v171 = vpop.f32.mrb[0].mxu0
    %172 = vdwg.mxu0
    %vm173 = vcmask 130048
    %v174 = vsel %vm173, %v97, -inf
    %175 = vmax.xlane.f32.xlu0 %v174
    %v176 = vpop.xlane.xlu0 %175
    %v177 = vsel %vm173, %v170, -inf
    %178 = vmax.xlane.f32.xlu0 %v177
    %v179 = vpop.xlane.xlu0 %178
    %v180 = vsub.f32 %v97, %v176
    %v181 = vsub.f32 %v170, %v179
    %v182 = vmul.f32 %v180, 1.442695
    %v183 = vpow.pop %v182
    %v184 = vmul.f32 %v181, 1.442695
    %v185 = vpow.pop %v184
    %v186 = vsel %vm173, %v183, 0.0
    %187 = vadd.xlane.f32.xlu0 %v186
    %v188 = vpop.xlane.xlu0 %187
    %v189 = vsel %vm173, %v185, 0.0
    %190 = vadd.xlane.f32.xlu0 %v189
    %v191 = vpop.xlane.xlu0 %190
    %v192 = vlog2.pop %v188
    %v193 = vmul.f32 %v192, 0.6931472
    %v194 = vlog2.pop %v191
    %v195 = vmul.f32 %v194, 0.6931472
    %v196 = vadd.f32 %v176, %v193
    %v197 = vadd.f32 %v179, %v195
    %v198 = vsub.f32 %v97, %v196
    %v199 = vsub.f32 %v170, %v197
    %v200 = vld [vmem:[%s2] sm:$0xff]
    %v201 = vld [vmem:[%s2 + $0x8] sm:$0xff]
    %203 = vset.pattern.permute.xlu0 0
    %204 = vperm.xlu0 %203, %v200
    %v205 = vpop.permute.xlu0 %204
    %208 = vset.pattern.permute.xlu0 0
    %209 = vperm.xlu0 %208, %v201
    %v210 = vpop.permute.xlu0 %209
    %v212 = vadd.f32 %v198, %v205
    %v213 = vadd.f32 %v199, %v210
    %v216 = vrot.slane %v212, 4
    %v217 = vrot.slane %v213, 4
    %v220 = vmax.f32 %v212, %v216
    %v221 = vmax.f32 %v213, %v217
    %v222 = vmin.f32 %v212, %v216
    %v223 = vmin.f32 %v213, %v217
    %v224 = vsub.f32 %v222, %v220
    %v225 = vsub.f32 %v223, %v221
    %v226 = vmul.f32 %v224, 1.442695
    %v227 = vpow.pop %v226
    %v228 = vmul.f32 %v225, 1.442695
    %v229 = vpow.pop %v228
    %v230 = vadd.f32 %v227, 1.0
    %v231 = vadd.f32 %v229, 1.0
    %v232 = vlog2.pop %v230
    %v233 = vmul.f32 %v232, 0.6931472
    %v234 = vlog2.pop %v231
    %v235 = vmul.f32 %v234, 0.6931472
    %v236 = vadd.f32 %v220, %v233
    %v237 = vadd.f32 %v221, %v235
    %vm238 = vcmask 125952
    %239 = vst.msk [vmem:[#allocation2] sm:$0xf] %vm238, %v198
    %240 = vst.msk [vmem:[#allocation2 + $0x4] sm:$0xf] %vm238, %v199
    %vm241 = vcmask 130052
    %242 = vst.msk [vmem:[#allocation4 - $0x4] sm:$0xf0] %vm241, %v198
    %243 = vst.msk [vmem:[#allocation4] sm:$0xf0] %vm241, %v199
    %244 = vst.msk [vmem:[#allocation6] sm:$0xf] %vm238, %v236
    %245 = vst.msk [vmem:[#allocation6 + $0x4] sm:$0xf] %vm238, %v237
    // Predicated region
    $region14: #{tpu_custom_call.1} parent=1 // pred_check
      _
    $region15: #{tpu_custom_call.1} parent=1 // pred_check_branch
      %247 = sbr.rel (0) target = $region17
    $region16: #{tpu_custom_call.1} parent=1 // pred_region
      %s249 = ssub.s32 128, 128
      %250 = vsyncadd [#allocation3], %s249
      %s251 = sshll.u32 [#allocation2], 4
      %s252 = int_to_ptr.vmem [resolvable:$true] %s251
      %257 = dma.vmem_to_hbm [thread:$0]  %s252, 128, %s3, [#allocation3], 64, 64, 4
    $region17: #{tpu_custom_call.1} parent=1 // pred_fallthru
      _
    // Predicated region
    $region18: #{tpu_custom_call.1} parent=1 // pred_check
      _
    $region19: #{tpu_custom_call.1} parent=1 // pred_check_branch
      %259 = sbr.rel (0) target = $region21
    $region20: #{tpu_custom_call.1} parent=1 // pred_region
      %s261 = ssub.s32 128, 128
      %262 = vsyncadd [#allocation5], %s261
      %s263 = sshll.u32 [#allocation4], 4
      %s264 = int_to_ptr.vmem [resolvable:$true] %s263
      %269 = dma.vmem_to_hbm [thread:$0]  %s264, 128, %s4, [#allocation5], 64, 64, 4
    $region21: #{tpu_custom_call.1} parent=1 // pred_fallthru
      _
    // Predicated region
    $region22: #{tpu_custom_call.1} parent=1 // pred_check
      _
    $region23: #{tpu_custom_call.1} parent=1 // pred_check_branch
      %271 = sbr.rel (0) target = $region25
    $region24: #{tpu_custom_call.1} parent=1 // pred_region
      %s273 = ssub.s32 128, 128
      %274 = vsyncadd [#allocation5], %s273
      %s275 = sshll.u32 [#allocation6], 4
      %s276 = int_to_ptr.vmem [resolvable:$true] %s275
      %281 = dma.vmem_to_hbm [thread:$0]  %s276, 128, %s5, [#allocation5], 64, 64, 4
    $region25: #{tpu_custom_call.1} parent=1 // pred_fallthru
      _
    // Predicated region
    $region26: #{tpu_custom_call.1} parent=1 // pred_check
      _
    $region27: #{tpu_custom_call.1} parent=1 // pred_check_branch
      %283 = sbr.rel (0) target = $region29
    $region28: #{tpu_custom_call.1} parent=1 // pred_region
      %284 = dma.done [#allocation3], 128
    $region29: #{tpu_custom_call.1} parent=1 // pred_fallthru
      _
    // Predicated region
    $region30: #{tpu_custom_call.1} parent=1 // pred_check
      _
    $region31: #{tpu_custom_call.1} parent=1 // pred_check_branch
      %286 = sbr.rel (0) target = $region33
    $region32: #{tpu_custom_call.1} parent=1 // pred_region
      %287 = dma.done [#allocation5], 128
    $region33: #{tpu_custom_call.1} parent=1 // pred_fallthru
      _
    // Predicated region
    $region34: #{tpu_custom_call.1} parent=1 // pred_check
      _
    $region35: #{tpu_custom_call.1} parent=1 // pred_check_branch
      %289 = sbr.rel (0) target = $region37
    $region36: #{tpu_custom_call.1} parent=1 // pred_region
      %290 = dma.done [#allocation5], 128
    $region37: #{tpu_custom_call.1} parent=1 // pred_fallthru
      _
    %291 = vsyncpa [#allocation3], 1
    %292 = vsyncpa [#allocation5], 1

</llo_original>
